<compile_context>
chip_gen: v7x
topology: tpu7x:2x2x1
jax: 0.10.0
libtpu: 0.0.40
codegen_flags: <defaults>
</compile_context>

<pallas_src>
import functools

import numpy as np
import jax
import jax.numpy as jnp
from jax.experimental import pallas as pl
from jax.experimental.pallas import tpu as pltpu


def _skyrmion_phi_kernel(x_ref, op_ref, o_ref):
    """x_ref: (8, Lp) zero-padded phi_diff, 8 identical sublanes (MXU-ready).
    op_ref: (Lp, Op) constant 0/+-1 operator encoding the shifted cumsum, the
    mirrored half and its sign.  o_ref: (1, Op) padded phi_i; columns [0, 2L)
    are valid, the rest are exact zeros."""
    x8 = x_ref[...]                                           # (8, Lp)
    sq8 = x8 * x8                                             # phi_diff ** 2
    # denominator == cumsum[-1] == total sum of squares (padding contributes 0)
    denom = jnp.sum(sq8[0:1, :], axis=1, keepdims=True)       # (1, 1)
    scale = np.float32(np.pi) / denom                         # exact reciprocal
    # one MXU matmul yields the unscaled [ phi | flip(-phi) | 0-pad ] row
    both = jnp.dot(sq8, op_ref[...],
                   precision=jax.lax.Precision.HIGHEST,
                   preferred_element_type=jnp.float32)[0:1, :]  # (1, Op)
    o_ref[...] = both * scale                                 # lane-dense store


@functools.lru_cache(maxsize=None)
def _skyrmion_operator(valid_len: int, l_pad: int, out_pad: int):
    """(Lp, Op) 0/+-1 matrix M such that  (phi_diff**2) @ M  equals the
    UNSCALED  concat(phi, flip(-phi))  laid out contiguously in columns [0, 2L):
      col j      (j < L): +1 for rows 1..j       ->  cum_j - sq_0
      col L + k  (k < L): -1 for rows 1..L-1-k   -> -(cum_{L-1-k} - sq_0)
    Row 0 and all padded rows/columns are 0 (so padded output lanes are 0)."""
    L = valid_len
    i = np.arange(l_pad)[:, None]
    j = np.arange(out_pad)[None, :]
    fwd = (i >= 1) & (i <= j) & (j < L)
    k = j - L
    bwd = (i >= 1) & (i <= L - 1 - k) & (j >= L) & (j < 2 * L)
    op = np.zeros((l_pad, out_pad), np.float32)
    op[fwd] = 1.0
    op[bwd] = -1.0
    return op


@jax.jit
def skyrmion_phi_i(phi_diff):
    """phi_i of HamModule_phi.set_phi_i('skyrmion'):
       concat(phi, flip(-phi)) with phi = cumsum(phi_diff**2) * pi / total,
       shifted so phi[0] == 0."""
    phi_diff = jnp.asarray(phi_diff, jnp.float32)   # TPU has no float64
    (L,) = phi_diff.shape
    l_pad = 128 * pl.cdiv(L, 128)                   # lane-dense input width
    out_pad = 128 * pl.cdiv(2 * L, 128)             # lane-dense output width

    x = jnp.zeros((1, l_pad), jnp.float32).at[0, :L].set(phi_diff)
    x8 = jnp.broadcast_to(x, (8, l_pad))            # wrapper-side layout plumbing
    op = jnp.asarray(_skyrmion_operator(L, l_pad, out_pad))  # baked-in constant

    # Large-L guard: the operator is O(L^2) bytes; keep it inside scoped VMEM.
    # TODO(synk): for L beyond a few thousand, switch to a column-tiled grid
    # (op BlockSpec (l_pad, tn), "parallel" axis) instead of raising the limit.
    op_bytes = l_pad * out_pad * 4
    compiler_params = None
    if op_bytes > 8 * (1 << 20):
        compiler_params = pltpu.CompilerParams(
            vmem_limit_bytes=min(2 * op_bytes + (4 << 20), 64 << 20))

    out = pl.pallas_call(
        _skyrmion_phi_kernel,
        out_shape=jax.ShapeDtypeStruct((1, out_pad), jnp.float32),
        in_specs=[pl.BlockSpec(memory_space=pltpu.MemorySpace.VMEM),
                  pl.BlockSpec(memory_space=pltpu.MemorySpace.VMEM)],
        out_specs=pl.BlockSpec(memory_space=pltpu.MemorySpace.VMEM),
        compiler_params=compiler_params,
    )(x8, op)

    # both halves are contiguous in the padded output: single slice, no concat
    return out[0, :2 * L]


if __name__ == "__main__":
    key = jax.random.PRNGKey(0)
    half_L = 8          # len(phi_diff); spin-chain length L = 2 * half_L = 16
    phi_diff = jax.random.uniform(key, (half_L,), dtype=jnp.float32,
                                  minval=0.1, maxval=1.0)

    phi_i = jax.block_until_ready(skyrmion_phi_i(phi_diff))

    # float32 reference of the PyTorch set_phi_i('skyrmion') math
    sq = phi_diff ** 2
    cum = jnp.cumsum(sq)
    phi = cum * jnp.float32(np.pi) / cum[-1]
    phi = phi - phi[0]
    ref = jnp.concatenate([phi, -phi[::-1]])

    assert phi_i.shape == (2 * half_L,)
    max_err = float(jnp.max(jnp.abs(phi_i - ref)))
    # f32 + HIGHEST-precision MXU + exact divide: errors are ~f32 eps scale
    assert max_err < 1e-4, f"phi_i mismatch vs reference (max abs err {max_err})"
    print("KERNEL_OK")
</pallas_src>

<mosaic_0001>
module attributes {stable_mosaic.version = 11 : i64} {
  func.func @_skyrmion_phi_kernel(%arg0: memref<8x128xf32, #tpu.memory_space<vmem>>, %arg1: memref<128x128xf32, #tpu.memory_space<vmem>>, %arg2: memref<1x128xf32, #tpu.memory_space<vmem>>) attributes {dimension_semantics = [], scalar_prefetch = 0 : i64, scratch_operands = 0 : i64, tpu.core_type = #tpu.core_type<tc>} {
    %c0 = arith.constant 0 : index
    %c0_0 = arith.constant 0 : index
    %0 = vector.load %arg0[%c0, %c0_0] : memref<8x128xf32, #tpu.memory_space<vmem>>, vector<8x128xf32>
    %1 = arith.mulf %0, %0 : vector<8x128xf32>
    %2 = vector.extract_strided_slice %1 {offsets = [0, 0], sizes = [1, 128], strides = [1, 1]} : vector<8x128xf32> to vector<1x128xf32>
    %cst = arith.constant dense<0.000000e+00> : vector<1xf32>
    %3 = vector.multi_reduction <add>, %2, %cst [1] : vector<1x128xf32> to vector<1xf32>
    %4 = vector.shape_cast %3 : vector<1xf32> to vector<1x1xf32>
    %cst_1 = arith.constant 3.14159274 : f32
    %5 = vector.broadcast %cst_1 : f32 to vector<1x1xf32>
    %6 = arith.divf %5, %4 : vector<1x1xf32>
    %c0_2 = arith.constant 0 : index
    %c0_3 = arith.constant 0 : index
    %7 = vector.load %arg1[%c0_2, %c0_3] : memref<128x128xf32, #tpu.memory_space<vmem>>, vector<128x128xf32>
    %cst_4 = arith.constant dense<0.000000e+00> : vector<8x128xf32>
    %8 = tpu.matmul %1, %7, %cst_4 {dimension_numbers = #tpu.dot_dimension_numbers<[1], [0], [0], [1], [0, 0, 1, 1], [], []>, precision = #tpu.contract_precision<fp32>} : vector<8x128xf32>, vector<128x128xf32>, vector<8x128xf32> -> vector<8x128xf32>
    %9 = vector.extract_strided_slice %8 {offsets = [0, 0], sizes = [1, 128], strides = [1, 1]} : vector<8x128xf32> to vector<1x128xf32>
    %10 = vector.broadcast %6 : vector<1x1xf32> to vector<1x128xf32>
    %11 = arith.mulf %9, %10 : vector<1x128xf32>
    %c0_5 = arith.constant 0 : index
    %c0_6 = arith.constant 0 : index
    %12 = vector.load %arg2[%c0_5, %c0_6] : memref<1x128xf32, #tpu.memory_space<vmem>>, vector<1x128xf32>
    tpu.vector_store %arg2[%c0_5, %c0_6], %11 {strides = array<i32>} : memref<1x128xf32, #tpu.memory_space<vmem>>, vector<1x128xf32>,
    return
  }
}

</mosaic_0001>

<llo_original>
// kernel: skyrmion_phi_i.1
$region0: #{skyrmion_phi_i.1}
  #allocation0 [shape = 'u32[]', space=smem, size = 0x4, offset = 0x4, fixed_abs, tag = 'smem constant byte address 0x4 - core index']
  #allocation1 [shape = 'u32[144,128]{1,0:T(1,128)}', space=vmem, size = 0x12000, scoped, tag = 'internal scratch']
  %s0 = inlined_call_operand.vmem [shape: f32[8,128], index: 0, kind: input, shape index: {}]
  %s1 = inlined_call_operand.hbm [shape: f32[128,128], index: 1, kind: input, shape index: {}]
  %s2 = inlined_call_operand.vmem [shape: f32[1,128], index: 2, kind: output, shape index: {}]
  %s3 = sld [smem:[#allocation0]]
  $region22: #{skyrmion_phi_i.1} parent=0
    _
  %s5 = ssub.s32 1, %s3
  %s6 = scalar_select 0, %s5, %s3
  $region1: #{skyrmion_phi_i.1} parent=0
    #allocation2 [shape = 'u8[65536]{0}', space=vmem, size = 0x10000, scoped, tag = 'input window, operand 1, single buffered']
    #allocation3 [shape = 's32[1]{0}', space=sflag, size = 0x4, scoped, tag = 'scoped memory for skyrmion_phi_i.1']
    %7 = vsyncpa [#allocation3], 0
    // Predicated region
    $region2: #{skyrmion_phi_i.1} parent=1 // pred_check
      _
    $region3: #{skyrmion_phi_i.1} parent=1 // pred_check_branch
      %9 = sbr.rel (0) target = $region5
    $region4: #{skyrmion_phi_i.1} parent=1 // pred_region
      _
    $region5: #{skyrmion_phi_i.1} parent=1 // pred_fallthru
      _
    // Predicated region
    $region6: #{skyrmion_phi_i.1} parent=1 // pred_check
      _
    $region7: #{skyrmion_phi_i.1} parent=1 // pred_check_branch
      %11 = sbr.rel (0) target = $region9
    $region8: #{skyrmion_phi_i.1} parent=1 // pred_region
      %s13 = ssub.s32 2048, 2048
      %14 = vsyncadd [#allocation3], %s13
      %s15 = sshll.u32 [#allocation2], 4
      %s16 = int_to_ptr.vmem [resolvable:$true] %s15
      %21 = dma.hbm_to_vmem [thread:$0]  %s1, 2048, %s16, [#allocation3], 128, 128, 8
    $region9: #{skyrmion_phi_i.1} parent=1 // pred_fallthru
      _
    // Predicated region
    $region10: #{skyrmion_phi_i.1} parent=1 // pred_check
      _
    $region11: #{skyrmion_phi_i.1} parent=1 // pred_check_branch
      %23 = sbr.rel (0) target = $region13
    $region12: #{skyrmion_phi_i.1} parent=1 // pred_region
      %24 = dma.done [#allocation3], 2048
    $region13: #{skyrmion_phi_i.1} parent=1 // pred_fallthru
      _
    %v25 = vld [vmem:[%s0] sm:$0xff]
    %v26 = vmul.f32 %v25, %v25
    %vm27 = vcmask 1040384
    %v28 = vsel %vm27, %v26, 0.0
    %29 = vadd.xlane.f32.xlu0 %v28
    %v30 = vpop.xlane.xlu0 %29
    %v31 = vrcp.pop %v30
    %v32 = vmul.f32 3.1415927, %v31
    %v33 = vld [vmem:[#allocation2] sm:$0xff]
    %v34 = vld [vmem:[#allocation2 + $0x8] sm:$0xff]
    %v35 = vld [vmem:[#allocation2 + $0x10] sm:$0xff]
    %v36 = vld [vmem:[#allocation2 + $0x18] sm:$0xff]
    %v37 = vld [vmem:[#allocation2 + $0x20] sm:$0xff]
    %v38 = vld [vmem:[#allocation2 + $0x28] sm:$0xff]
    %v39 = vld [vmem:[#allocation2 + $0x30] sm:$0xff]
    %v40 = vld [vmem:[#allocation2 + $0x38] sm:$0xff]
    %v41 = vld [vmem:[#allocation2 + $0x40] sm:$0xff]
    %v42 = vld [vmem:[#allocation2 + $0x48] sm:$0xff]
    %v43 = vld [vmem:[#allocation2 + $0x50] sm:$0xff]
    %v44 = vld [vmem:[#allocation2 + $0x58] sm:$0xff]
    %v45 = vld [vmem:[#allocation2 + $0x60] sm:$0xff]
    %v46 = vld [vmem:[#allocation2 + $0x68] sm:$0xff]
    %v47 = vld [vmem:[#allocation2 + $0x70] sm:$0xff]
    %v48 = vld [vmem:[#allocation2 + $0x78] sm:$0xff]
    %49 = vmatprep.subr.mxu0 0.0
    %v50 = vand.u32 %v33, 4294901760
    %51 = vmatpush1.msra.mxu0 %v50
    %52 = vmatprep.subr.mxu0 0.0
    %v53 = vand.u32 %v34, 4294901760
    %54 = vmatpush1.msra.mxu0 %v53
    %55 = vmatprep.subr.mxu0 0.0
    %v56 = vand.u32 %v35, 4294901760
    %57 = vmatpush1.msra.mxu0 %v56
    %58 = vmatprep.subr.mxu0 0.0
    %v59 = vand.u32 %v36, 4294901760
    %60 = vmatpush1.msra.mxu0 %v59
    %61 = vmatprep.subr.mxu0 0.0
    %v62 = vand.u32 %v37, 4294901760
    %63 = vmatpush1.msra.mxu0 %v62
    %64 = vmatprep.subr.mxu0 0.0
    %v65 = vand.u32 %v38, 4294901760
    %66 = vmatpush1.msra.mxu0 %v65
    %67 = vmatprep.subr.mxu0 0.0
    %v68 = vand.u32 %v39, 4294901760
    %69 = vmatpush1.msra.mxu0 %v68
    %70 = vmatprep.subr.mxu0 0.0
    %v71 = vand.u32 %v40, 4294901760
    %72 = vmatpush1.msra.mxu0 %v71
    %73 = vmatprep.subr.mxu0 0.0
    %v74 = vand.u32 %v41, 4294901760
    %75 = vmatpush1.msra.mxu0 %v74
    %76 = vmatprep.subr.mxu0 0.0
    %v77 = vand.u32 %v42, 4294901760
    %78 = vmatpush1.msra.mxu0 %v77
    %79 = vmatprep.subr.mxu0 0.0
    %v80 = vand.u32 %v43, 4294901760
    %81 = vmatpush1.msra.mxu0 %v80
    %82 = vmatprep.subr.mxu0 0.0
    %v83 = vand.u32 %v44, 4294901760
    %84 = vmatpush1.msra.mxu0 %v83
    %85 = vmatprep.subr.mxu0 0.0
    %v86 = vand.u32 %v45, 4294901760
    %87 = vmatpush1.msra.mxu0 %v86
    %88 = vmatprep.subr.mxu0 0.0
    %v89 = vand.u32 %v46, 4294901760
    %90 = vmatpush1.msra.mxu0 %v89
    %91 = vmatprep.subr.mxu0 0.0
    %v92 = vand.u32 %v47, 4294901760
    %93 = vmatpush1.msra.mxu0 %v92
    %94 = vmatprep.subr.mxu0 0.0
    %v95 = vand.u32 %v48, 4294901760
    %96 = vmatpush1.msra.mxu0 %v95
    %97 = vmatprep.subr.mxu0 0.0
    %98 = vmatpush1.msra.mxu0 0.0
    %99 = vmatprep.subr.mxu0 0.0
    %100 = vmatpush1.msra.mxu0 0.0
    %101 = vmatprep.subr.mxu0 0.0
    %102 = vmatpush1.msra.mxu0 0.0
    %103 = vmatprep.subr.mxu0 0.0
    %104 = vmatpush1.msra.mxu0 0.0
    %105 = vmatprep.subr.mxu0 0.0
    %106 = vmatpush1.msra.mxu0 0.0
    %107 = vmatprep.subr.mxu0 0.0
    %108 = vmatpush1.msra.mxu0 0.0
    %109 = vmatprep.subr.mxu0 0.0
    %110 = vmatpush1.msra.mxu0 0.0
    %111 = vmatprep.subr.mxu0 0.0
    %112 = vmatpush1.msra.mxu0 0.0
    %113 = vmatprep.subr.mxu0 0.0
    %114 = vmatpush1.msra.mxu0 0.0
    %115 = vmatprep.subr.mxu0 0.0
    %116 = vmatpush1.msra.mxu0 0.0
    %117 = vmatprep.subr.mxu0 0.0
    %118 = vmatpush1.msra.mxu0 0.0
    %119 = vmatprep.subr.mxu0 0.0
    %120 = vmatpush1.msra.mxu0 0.0
    %121 = vmatprep.subr.mxu0 0.0
    %122 = vmatpush1.msra.mxu0 0.0
    %123 = vmatprep.subr.mxu0 0.0
    %124 = vmatpush1.msra.mxu0 0.0
    %125 = vmatprep.subr.mxu0 0.0
    %126 = vmatpush1.msra.mxu0 0.0
    %127 = vmatprep.subr.mxu0 0.0
    %128 = vmatpush1.msra.mxu0 0.0
    %129 = vmatprep.mubr.f32.mxu0 0.0
    %v130 = vand.u32 %v26, 4294901760
    %v131 = vsub.f32 %v26, %v130
    %v132 = vand.u32 %v131, 4294901760
    %v133 = vsub.f32 %v131, %v132
    %v134 = vand.u32 %v133, 4294901760
    %135 = vmatmul.mubr.f32.gmra.mrb[0].mxu0 %v134
    %v136 = vpop.f32.mrb[0].mxu0
    %v137 = vadd.f32 0.0, %v136
    %v138 = vpop.f32.mrb[0].mxu0
    %139 = vdwg.mxu0
    %140 = vmatprep.subr.mxu0 0.0
    %v141 = vand.u32 %v33, 4294901760
    %v142 = vsub.f32 %v33, %v141
    %v143 = vand.u32 %v142, 4294901760
    %v144 = vsub.f32 %v142, %v143
    %v145 = vand.u32 %v144, 4294901760
    %146 = vmatpush1.msra.mxu0 %v145
    %147 = vmatprep.subr.mxu0 0.0
    %v148 = vand.u32 %v34, 4294901760
    %v149 = vsub.f32 %v34, %v148
    %v150 = vand.u32 %v149, 4294901760
    %v151 = vsub.f32 %v149, %v150
    %v152 = vand.u32 %v151, 4294901760
    %153 = vmatpush1.msra.mxu0 %v152
    %154 = vmatprep.subr.mxu0 0.0
    %v155 = vand.u32 %v35, 4294901760
    %v156 = vsub.f32 %v35, %v155
    %v157 = vand.u32 %v156, 4294901760
    %v158 = vsub.f32 %v156, %v157
    %v159 = vand.u32 %v158, 4294901760
    %160 = vmatpush1.msra.mxu0 %v159
    %161 = vmatprep.subr.mxu0 0.0
    %v162 = vand.u32 %v36, 4294901760
    %v163 = vsub.f32 %v36, %v162
    %v164 = vand.u32 %v163, 4294901760
    %v165 = vsub.f32 %v163, %v164
    %v166 = vand.u32 %v165, 4294901760
    %167 = vmatpush1.msra.mxu0 %v166
    %168 = vmatprep.subr.mxu0 0.0
    %v169 = vand.u32 %v37, 4294901760
    %v170 = vsub.f32 %v37, %v169
    %v171 = vand.u32 %v170, 4294901760
    %v172 = vsub.f32 %v170, %v171
    %v173 = vand.u32 %v172, 4294901760
    %174 = vmatpush1.msra.mxu0 %v173
    %175 = vmatprep.subr.mxu0 0.0
    %v176 = vand.u32 %v38, 4294901760
    %v177 = vsub.f32 %v38, %v176
    %v178 = vand.u32 %v177, 4294901760
    %v179 = vsub.f32 %v177, %v178
    %v180 = vand.u32 %v179, 4294901760
    %181 = vmatpush1.msra.mxu0 %v180
    %182 = vmatprep.subr.mxu0 0.0
    %v183 = vand.u32 %v39, 4294901760
    %v184 = vsub.f32 %v39, %v183
    %v185 = vand.u32 %v184, 4294901760
    %v186 = vsub.f32 %v184, %v185
    %v187 = vand.u32 %v186, 4294901760
    %188 = vmatpush1.msra.mxu0 %v187
    %189 = vmatprep.subr.mxu0 0.0
    %v190 = vand.u32 %v40, 4294901760
    %v191 = vsub.f32 %v40, %v190
    %v192 = vand.u32 %v191, 4294901760
    %v193 = vsub.f32 %v191, %v192
    %v194 = vand.u32 %v193, 4294901760
    %195 = vmatpush1.msra.mxu0 %v194
    %196 = vmatprep.subr.mxu0 0.0
    %v197 = vand.u32 %v41, 4294901760
    %v198 = vsub.f32 %v41, %v197
    %v199 = vand.u32 %v198, 4294901760
    %v200 = vsub.f32 %v198, %v199
    %v201 = vand.u32 %v200, 4294901760
    %202 = vmatpush1.msra.mxu0 %v201
    %203 = vmatprep.subr.mxu0 0.0
    %v204 = vand.u32 %v42, 4294901760
    %v205 = vsub.f32 %v42, %v204
    %v206 = vand.u32 %v205, 4294901760
    %v207 = vsub.f32 %v205, %v206
    %v208 = vand.u32 %v207, 4294901760
    %209 = vmatpush1.msra.mxu0 %v208
    %210 = vmatprep.subr.mxu0 0.0
    %v211 = vand.u32 %v43, 4294901760
    %v212 = vsub.f32 %v43, %v211
    %v213 = vand.u32 %v212, 4294901760
    %v214 = vsub.f32 %v212, %v213
    %v215 = vand.u32 %v214, 4294901760
    %216 = vmatpush1.msra.mxu0 %v215
    %217 = vmatprep.subr.mxu0 0.0
    %v218 = vand.u32 %v44, 4294901760
    %v219 = vsub.f32 %v44, %v218
    %v220 = vand.u32 %v219, 4294901760
    %v221 = vsub.f32 %v219, %v220
    %v222 = vand.u32 %v221, 4294901760
    %223 = vmatpush1.msra.mxu0 %v222
    %224 = vmatprep.subr.mxu0 0.0
    %v225 = vand.u32 %v45, 4294901760
    %v226 = vsub.f32 %v45, %v225
    %v227 = vand.u32 %v226, 4294901760
    %v228 = vsub.f32 %v226, %v227
    %v229 = vand.u32 %v228, 4294901760
    %230 = vmatpush1.msra.mxu0 %v229
    %231 = vmatprep.subr.mxu0 0.0
    %v232 = vand.u32 %v46, 4294901760
    %v233 = vsub.f32 %v46, %v232
    %v234 = vand.u32 %v233, 4294901760
    %v235 = vsub.f32 %v233, %v234
    %v236 = vand.u32 %v235, 4294901760
    %237 = vmatpush1.msra.mxu0 %v236
    %238 = vmatprep.subr.mxu0 0.0
    %v239 = vand.u32 %v47, 4294901760
    %v240 = vsub.f32 %v47, %v239
    %v241 = vand.u32 %v240, 4294901760
    %v242 = vsub.f32 %v240, %v241
    %v243 = vand.u32 %v242, 4294901760
    %244 = vmatpush1.msra.mxu0 %v243
    %245 = vmatprep.subr.mxu0 0.0
    %v246 = vand.u32 %v48, 4294901760
    %v247 = vsub.f32 %v48, %v246
    %v248 = vand.u32 %v247, 4294901760
    %v249 = vsub.f32 %v247, %v248
    %v250 = vand.u32 %v249, 4294901760
    %251 = vmatpush1.msra.mxu0 %v250
    %252 = vmatprep.subr.mxu0 0.0
    %253 = vmatpush1.msra.mxu0 0.0
    %254 = vmatprep.subr.mxu0 0.0
    %255 = vmatpush1.msra.mxu0 0.0
    %256 = vmatprep.subr.mxu0 0.0
    %257 = vmatpush1.msra.mxu0 0.0
    %258 = vmatprep.subr.mxu0 0.0
    %259 = vmatpush1.msra.mxu0 0.0
    %260 = vmatprep.subr.mxu0 0.0
    %261 = vmatpush1.msra.mxu0 0.0
    %262 = vmatprep.subr.mxu0 0.0
    %263 = vmatpush1.msra.mxu0 0.0
    %264 = vmatprep.subr.mxu0 0.0
    %265 = vmatpush1.msra.mxu0 0.0
    %266 = vmatprep.subr.mxu0 0.0
    %267 = vmatpush1.msra.mxu0 0.0
    %268 = vmatprep.subr.mxu0 0.0
    %269 = vmatpush1.msra.mxu0 0.0
    %270 = vmatprep.subr.mxu0 0.0
    %271 = vmatpush1.msra.mxu0 0.0
    %272 = vmatprep.subr.mxu0 0.0
    %273 = vmatpush1.msra.mxu0 0.0
    %274 = vmatprep.subr.mxu0 0.0
    %275 = vmatpush1.msra.mxu0 0.0
    %276 = vmatprep.subr.mxu0 0.0
    %277 = vmatpush1.msra.mxu0 0.0
    %278 = vmatprep.subr.mxu0 0.0
    %279 = vmatpush1.msra.mxu0 0.0
    %280 = vmatprep.subr.mxu0 0.0
    %281 = vmatpush1.msra.mxu0 0.0
    %282 = vmatprep.subr.mxu0 0.0
    %283 = vmatpush1.msra.mxu0 0.0
    %284 = vmatprep.mubr.f32.mxu0 0.0
    %v285 = vand.u32 %v26, 4294901760
    %286 = vmatmul.mubr.f32.gmra.mrb[0].mxu0 %v285
    %v287 = vpop.f32.mrb[0].mxu0
    %v288 = vadd.f32 %v137, %v287
    %v289 = vpop.f32.mrb[0].mxu0
    %290 = vdwg.mxu0
    %291 = vmatprep.subr.mxu0 0.0
    %v292 = vand.u32 %v33, 4294901760
    %v293 = vsub.f32 %v33, %v292
    %294 = vmatpush1.msra.mxu0 %v293
    %295 = vmatprep.subr.mxu0 0.0
    %v296 = vand.u32 %v34, 4294901760
    %v297 = vsub.f32 %v34, %v296
    %298 = vmatpush1.msra.mxu0 %v297
    %299 = vmatprep.subr.mxu0 0.0
    %v300 = vand.u32 %v35, 4294901760
    %v301 = vsub.f32 %v35, %v300
    %302 = vmatpush1.msra.mxu0 %v301
    %303 = vmatprep.subr.mxu0 0.0
    %v304 = vand.u32 %v36, 4294901760
    %v305 = vsub.f32 %v36, %v304
    %306 = vmatpush1.msra.mxu0 %v305
    %307 = vmatprep.subr.mxu0 0.0
    %v308 = vand.u32 %v37, 4294901760
    %v309 = vsub.f32 %v37, %v308
    %310 = vmatpush1.msra.mxu0 %v309
    %311 = vmatprep.subr.mxu0 0.0
    %v312 = vand.u32 %v38, 4294901760
    %v313 = vsub.f32 %v38, %v312
    %314 = vmatpush1.msra.mxu0 %v313
    %315 = vmatprep.subr.mxu0 0.0
    %v316 = vand.u32 %v39, 4294901760
    %v317 = vsub.f32 %v39, %v316
    %318 = vmatpush1.msra.mxu0 %v317
    %319 = vmatprep.subr.mxu0 0.0
    %v320 = vand.u32 %v40, 4294901760
    %v321 = vsub.f32 %v40, %v320
    %322 = vmatpush1.msra.mxu0 %v321
    %323 = vmatprep.subr.mxu0 0.0
    %v324 = vand.u32 %v41, 4294901760
    %v325 = vsub.f32 %v41, %v324
    %326 = vmatpush1.msra.mxu0 %v325
    %327 = vmatprep.subr.mxu0 0.0
    %v328 = vand.u32 %v42, 4294901760
    %v329 = vsub.f32 %v42, %v328
    %330 = vmatpush1.msra.mxu0 %v329
    %331 = vmatprep.subr.mxu0 0.0
    %v332 = vand.u32 %v43, 4294901760
    %v333 = vsub.f32 %v43, %v332
    %334 = vmatpush1.msra.mxu0 %v333
    %335 = vmatprep.subr.mxu0 0.0
    %v336 = vand.u32 %v44, 4294901760
    %v337 = vsub.f32 %v44, %v336
    %338 = vmatpush1.msra.mxu0 %v337
    %339 = vmatprep.subr.mxu0 0.0
    %v340 = vand.u32 %v45, 4294901760
    %v341 = vsub.f32 %v45, %v340
    %342 = vmatpush1.msra.mxu0 %v341
    %343 = vmatprep.subr.mxu0 0.0
    %v344 = vand.u32 %v46, 4294901760
    %v345 = vsub.f32 %v46, %v344
    %346 = vmatpush1.msra.mxu0 %v345
    %347 = vmatprep.subr.mxu0 0.0
    %v348 = vand.u32 %v47, 4294901760
    %v349 = vsub.f32 %v47, %v348
    %350 = vmatpush1.msra.mxu0 %v349
    %351 = vmatprep.subr.mxu0 0.0
    %v352 = vand.u32 %v48, 4294901760
    %v353 = vsub.f32 %v48, %v352
    %354 = vmatpush1.msra.mxu0 %v353
    %355 = vmatprep.subr.mxu0 0.0
    %356 = vmatpush1.msra.mxu0 0.0
    %357 = vmatprep.subr.mxu0 0.0
    %358 = vmatpush1.msra.mxu0 0.0
    %359 = vmatprep.subr.mxu0 0.0
    %360 = vmatpush1.msra.mxu0 0.0
    %361 = vmatprep.subr.mxu0 0.0
    %362 = vmatpush1.msra.mxu0 0.0
    %363 = vmatprep.subr.mxu0 0.0
    %364 = vmatpush1.msra.mxu0 0.0
    %365 = vmatprep.subr.mxu0 0.0
    %366 = vmatpush1.msra.mxu0 0.0
    %367 = vmatprep.subr.mxu0 0.0
    %368 = vmatpush1.msra.mxu0 0.0
    %369 = vmatprep.subr.mxu0 0.0
    %370 = vmatpush1.msra.mxu0 0.0
    %371 = vmatprep.subr.mxu0 0.0
    %372 = vmatpush1.msra.mxu0 0.0
    %373 = vmatprep.subr.mxu0 0.0
    %374 = vmatpush1.msra.mxu0 0.0
    %375 = vmatprep.subr.mxu0 0.0
    %376 = vmatpush1.msra.mxu0 0.0
    %377 = vmatprep.subr.mxu0 0.0
    %378 = vmatpush1.msra.mxu0 0.0
    %379 = vmatprep.subr.mxu0 0.0
    %380 = vmatpush1.msra.mxu0 0.0
    %381 = vmatprep.subr.mxu0 0.0
    %382 = vmatpush1.msra.mxu0 0.0
    %383 = vmatprep.subr.mxu0 0.0
    %384 = vmatpush1.msra.mxu0 0.0
    %385 = vmatprep.subr.mxu0 0.0
    %386 = vmatpush1.msra.mxu0 0.0
    %387 = vmatprep.mubr.f32.mxu0 0.0
    %v388 = vand.u32 %v26, 4294901760
    %v389 = vsub.f32 %v26, %v388
    %390 = vmatmul.mubr.f32.gmra.mrb[0].mxu0 %v389
    %v391 = vpop.f32.mrb[0].mxu0
    %v392 = vadd.f32 %v288, %v391
    %v393 = vpop.f32.mrb[0].mxu0
    %394 = vdwg.mxu0
    %395 = vmatprep.subr.mxu0 0.0
    %v396 = vand.u32 %v33, 4294901760
    %397 = vmatpush1.msra.mxu0 %v396
    %398 = vmatprep.subr.mxu0 0.0
    %v399 = vand.u32 %v34, 4294901760
    %400 = vmatpush1.msra.mxu0 %v399
    %401 = vmatprep.subr.mxu0 0.0
    %v402 = vand.u32 %v35, 4294901760
    %403 = vmatpush1.msra.mxu0 %v402
    %404 = vmatprep.subr.mxu0 0.0
    %v405 = vand.u32 %v36, 4294901760
    %406 = vmatpush1.msra.mxu0 %v405
    %407 = vmatprep.subr.mxu0 0.0
    %v408 = vand.u32 %v37, 4294901760
    %409 = vmatpush1.msra.mxu0 %v408
    %410 = vmatprep.subr.mxu0 0.0
    %v411 = vand.u32 %v38, 4294901760
    %412 = vmatpush1.msra.mxu0 %v411
    %413 = vmatprep.subr.mxu0 0.0
    %v414 = vand.u32 %v39, 4294901760
    %415 = vmatpush1.msra.mxu0 %v414
    %416 = vmatprep.subr.mxu0 0.0
    %v417 = vand.u32 %v40, 4294901760
    %418 = vmatpush1.msra.mxu0 %v417
    %419 = vmatprep.subr.mxu0 0.0
    %v420 = vand.u32 %v41, 4294901760
    %421 = vmatpush1.msra.mxu0 %v420
    %422 = vmatprep.subr.mxu0 0.0
    %v423 = vand.u32 %v42, 4294901760
    %424 = vmatpush1.msra.mxu0 %v423
    %425 = vmatprep.subr.mxu0 0.0
    %v426 = vand.u32 %v43, 4294901760
    %427 = vmatpush1.msra.mxu0 %v426
    %428 = vmatprep.subr.mxu0 0.0
    %v429 = vand.u32 %v44, 4294901760
    %430 = vmatpush1.msra.mxu0 %v429
    %431 = vmatprep.subr.mxu0 0.0
    %v432 = vand.u32 %v45, 4294901760
    %433 = vmatpush1.msra.mxu0 %v432
    %434 = vmatprep.subr.mxu0 0.0
    %v435 = vand.u32 %v46, 4294901760
    %436 = vmatpush1.msra.mxu0 %v435
    %437 = vmatprep.subr.mxu0 0.0
    %v438 = vand.u32 %v47, 4294901760
    %439 = vmatpush1.msra.mxu0 %v438
    %440 = vmatprep.subr.mxu0 0.0
    %v441 = vand.u32 %v48, 4294901760
    %442 = vmatpush1.msra.mxu0 %v441
    %443 = vmatprep.subr.mxu0 0.0
    %444 = vmatpush1.msra.mxu0 0.0
    %445 = vmatprep.subr.mxu0 0.0
    %446 = vmatpush1.msra.mxu0 0.0
    %447 = vmatprep.subr.mxu0 0.0
    %448 = vmatpush1.msra.mxu0 0.0
    %449 = vmatprep.subr.mxu0 0.0
    %450 = vmatpush1.msra.mxu0 0.0
    %451 = vmatprep.subr.mxu0 0.0
    %452 = vmatpush1.msra.mxu0 0.0
    %453 = vmatprep.subr.mxu0 0.0
    %454 = vmatpush1.msra.mxu0 0.0
    %455 = vmatprep.subr.mxu0 0.0
    %456 = vmatpush1.msra.mxu0 0.0
    %457 = vmatprep.subr.mxu0 0.0
    %458 = vmatpush1.msra.mxu0 0.0
    %459 = vmatprep.subr.mxu0 0.0
    %460 = vmatpush1.msra.mxu0 0.0
    %461 = vmatprep.subr.mxu0 0.0
    %462 = vmatpush1.msra.mxu0 0.0
    %463 = vmatprep.subr.mxu0 0.0
    %464 = vmatpush1.msra.mxu0 0.0
    %465 = vmatprep.subr.mxu0 0.0
    %466 = vmatpush1.msra.mxu0 0.0
    %467 = vmatprep.subr.mxu0 0.0
    %468 = vmatpush1.msra.mxu0 0.0
    %469 = vmatprep.subr.mxu0 0.0
    %470 = vmatpush1.msra.mxu0 0.0
    %471 = vmatprep.subr.mxu0 0.0
    %472 = vmatpush1.msra.mxu0 0.0
    %473 = vmatprep.subr.mxu0 0.0
    %474 = vmatpush1.msra.mxu0 0.0
    %475 = vmatprep.mubr.f32.mxu0 0.0
    %v476 = vand.u32 %v26, 4294901760
    %v477 = vsub.f32 %v26, %v476
    %v478 = vand.u32 %v477, 4294901760
    %479 = vmatmul.mubr.f32.gmra.mrb[0].mxu0 %v478
    %v480 = vpop.f32.mrb[0].mxu0
    %v481 = vadd.f32 %v392, %v480
    %v482 = vpop.f32.mrb[0].mxu0
    %483 = vdwg.mxu0
    %484 = vmatprep.subr.mxu0 0.0
    %v485 = vand.u32 %v33, 4294901760
    %v486 = vsub.f32 %v33, %v485
    %v487 = vand.u32 %v486, 4294901760
    %488 = vmatpush1.msra.mxu0 %v487
    %489 = vmatprep.subr.mxu0 0.0
    %v490 = vand.u32 %v34, 4294901760
    %v491 = vsub.f32 %v34, %v490
    %v492 = vand.u32 %v491, 4294901760
    %493 = vmatpush1.msra.mxu0 %v492
    %494 = vmatprep.subr.mxu0 0.0
    %v495 = vand.u32 %v35, 4294901760
    %v496 = vsub.f32 %v35, %v495
    %v497 = vand.u32 %v496, 4294901760
    %498 = vmatpush1.msra.mxu0 %v497
    %499 = vmatprep.subr.mxu0 0.0
    %v500 = vand.u32 %v36, 4294901760
    %v501 = vsub.f32 %v36, %v500
    %v502 = vand.u32 %v501, 4294901760
    %503 = vmatpush1.msra.mxu0 %v502
    %504 = vmatprep.subr.mxu0 0.0
    %v505 = vand.u32 %v37, 4294901760
    %v506 = vsub.f32 %v37, %v505
    %v507 = vand.u32 %v506, 4294901760
    %508 = vmatpush1.msra.mxu0 %v507
    %509 = vmatprep.subr.mxu0 0.0
    %v510 = vand.u32 %v38, 4294901760
    %v511 = vsub.f32 %v38, %v510
    %v512 = vand.u32 %v511, 4294901760
    %513 = vmatpush1.msra.mxu0 %v512
    %514 = vmatprep.subr.mxu0 0.0
    %v515 = vand.u32 %v39, 4294901760
    %v516 = vsub.f32 %v39, %v515
    %v517 = vand.u32 %v516, 4294901760
    %518 = vmatpush1.msra.mxu0 %v517
    %519 = vmatprep.subr.mxu0 0.0
    %v520 = vand.u32 %v40, 4294901760
    %v521 = vsub.f32 %v40, %v520
    %v522 = vand.u32 %v521, 4294901760
    %523 = vmatpush1.msra.mxu0 %v522
    %524 = vmatprep.subr.mxu0 0.0
    %v525 = vand.u32 %v41, 4294901760
    %v526 = vsub.f32 %v41, %v525
    %v527 = vand.u32 %v526, 4294901760
    %528 = vmatpush1.msra.mxu0 %v527
    %529 = vmatprep.subr.mxu0 0.0
    %v530 = vand.u32 %v42, 4294901760
    %v531 = vsub.f32 %v42, %v530
    %v532 = vand.u32 %v531, 4294901760
    %533 = vmatpush1.msra.mxu0 %v532
    %534 = vmatprep.subr.mxu0 0.0
    %v535 = vand.u32 %v43, 4294901760
    %v536 = vsub.f32 %v43, %v535
    %v537 = vand.u32 %v536, 4294901760
    %538 = vmatpush1.msra.mxu0 %v537
    %539 = vmatprep.subr.mxu0 0.0
    %v540 = vand.u32 %v44, 4294901760
    %v541 = vsub.f32 %v44, %v540
    %v542 = vand.u32 %v541, 4294901760
    %543 = vmatpush1.msra.mxu0 %v542
    %544 = vmatprep.subr.mxu0 0.0
    %v545 = vand.u32 %v45, 4294901760
    %v546 = vsub.f32 %v45, %v545
    %v547 = vand.u32 %v546, 4294901760
    %548 = vmatpush1.msra.mxu0 %v547
    %549 = vmatprep.subr.mxu0 0.0
    %v550 = vand.u32 %v46, 4294901760
    %v551 = vsub.f32 %v46, %v550
    %v552 = vand.u32 %v551, 4294901760
    %553 = vmatpush1.msra.mxu0 %v552
    %554 = vmatprep.subr.mxu0 0.0
    %v555 = vand.u32 %v47, 4294901760
    %v556 = vsub.f32 %v47, %v555
    %v557 = vand.u32 %v556, 4294901760
    %558 = vmatpush1.msra.mxu0 %v557
    %559 = vmatprep.subr.mxu0 0.0
    %v560 = vand.u32 %v48, 4294901760
    %v561 = vsub.f32 %v48, %v560
    %v562 = vand.u32 %v561, 4294901760
    %563 = vmatpush1.msra.mxu0 %v562
    %564 = vmatprep.subr.mxu0 0.0
    %565 = vmatpush1.msra.mxu0 0.0
    %566 = vmatprep.subr.mxu0 0.0
    %567 = vmatpush1.msra.mxu0 0.0
    %568 = vmatprep.subr.mxu0 0.0
    %569 = vmatpush1.msra.mxu0 0.0
    %570 = vmatprep.subr.mxu0 0.0
    %571 = vmatpush1.msra.mxu0 0.0
    %572 = vmatprep.subr.mxu0 0.0
    %573 = vmatpush1.msra.mxu0 0.0
    %574 = vmatprep.subr.mxu0 0.0
    %575 = vmatpush1.msra.mxu0 0.0
    %576 = vmatprep.subr.mxu0 0.0
    %577 = vmatpush1.msra.mxu0 0.0
    %578 = vmatprep.subr.mxu0 0.0
    %579 = vmatpush1.msra.mxu0 0.0
    %580 = vmatprep.subr.mxu0 0.0
    %581 = vmatpush1.msra.mxu0 0.0
    %582 = vmatprep.subr.mxu0 0.0
    %583 = vmatpush1.msra.mxu0 0.0
    %584 = vmatprep.subr.mxu0 0.0
    %585 = vmatpush1.msra.mxu0 0.0
    %586 = vmatprep.subr.mxu0 0.0
    %587 = vmatpush1.msra.mxu0 0.0
    %588 = vmatprep.subr.mxu0 0.0
    %589 = vmatpush1.msra.mxu0 0.0
    %590 = vmatprep.subr.mxu0 0.0
    %591 = vmatpush1.msra.mxu0 0.0
    %592 = vmatprep.subr.mxu0 0.0
    %593 = vmatpush1.msra.mxu0 0.0
    %594 = vmatprep.subr.mxu0 0.0
    %595 = vmatpush1.msra.mxu0 0.0
    %596 = vmatprep.mubr.f32.mxu0 0.0
    %v597 = vand.u32 %v26, 4294901760
    %598 = vmatmul.mubr.f32.gmra.mrb[0].mxu0 %v597
    %v599 = vpop.f32.mrb[0].mxu0
    %v600 = vadd.f32 %v481, %v599
    %v601 = vpop.f32.mrb[0].mxu0
    %602 = vdwg.mxu0
    %603 = vmatprep.subr.mxu0 0.0
    %v604 = vand.u32 %v33, 4294901760
    %605 = vmatpush1.msra.mxu0 %v604
    %606 = vmatprep.subr.mxu0 0.0
    %v607 = vand.u32 %v34, 4294901760
    %608 = vmatpush1.msra.mxu0 %v607
    %609 = vmatprep.subr.mxu0 0.0
    %v610 = vand.u32 %v35, 4294901760
    %611 = vmatpush1.msra.mxu0 %v610
    %612 = vmatprep.subr.mxu0 0.0
    %v613 = vand.u32 %v36, 4294901760
    %614 = vmatpush1.msra.mxu0 %v613
    %615 = vmatprep.subr.mxu0 0.0
    %v616 = vand.u32 %v37, 4294901760
    %617 = vmatpush1.msra.mxu0 %v616
    %618 = vmatprep.subr.mxu0 0.0
    %v619 = vand.u32 %v38, 4294901760
    %620 = vmatpush1.msra.mxu0 %v619
    %621 = vmatprep.subr.mxu0 0.0
    %v622 = vand.u32 %v39, 4294901760
    %623 = vmatpush1.msra.mxu0 %v622
    %624 = vmatprep.subr.mxu0 0.0
    %v625 = vand.u32 %v40, 4294901760
    %626 = vmatpush1.msra.mxu0 %v625
    %627 = vmatprep.subr.mxu0 0.0
    %v628 = vand.u32 %v41, 4294901760
    %629 = vmatpush1.msra.mxu0 %v628
    %630 = vmatprep.subr.mxu0 0.0
    %v631 = vand.u32 %v42, 4294901760
    %632 = vmatpush1.msra.mxu0 %v631
    %633 = vmatprep.subr.mxu0 0.0
    %v634 = vand.u32 %v43, 4294901760
    %635 = vmatpush1.msra.mxu0 %v634
    %636 = vmatprep.subr.mxu0 0.0
    %v637 = vand.u32 %v44, 4294901760
    %638 = vmatpush1.msra.mxu0 %v637
    %639 = vmatprep.subr.mxu0 0.0
    %v640 = vand.u32 %v45, 4294901760
    %641 = vmatpush1.msra.mxu0 %v640
    %642 = vmatprep.subr.mxu0 0.0
    %v643 = vand.u32 %v46, 4294901760
    %644 = vmatpush1.msra.mxu0 %v643
    %645 = vmatprep.subr.mxu0 0.0
    %v646 = vand.u32 %v47, 4294901760
    %647 = vmatpush1.msra.mxu0 %v646
    %648 = vmatprep.subr.mxu0 0.0
    %v649 = vand.u32 %v48, 4294901760
    %650 = vmatpush1.msra.mxu0 %v649
    %651 = vmatprep.subr.mxu0 0.0
    %652 = vmatpush1.msra.mxu0 0.0
    %653 = vmatprep.subr.mxu0 0.0
    %654 = vmatpush1.msra.mxu0 0.0
    %655 = vmatprep.subr.mxu0 0.0
    %656 = vmatpush1.msra.mxu0 0.0
    %657 = vmatprep.subr.mxu0 0.0
    %658 = vmatpush1.msra.mxu0 0.0
    %659 = vmatprep.subr.mxu0 0.0
    %660 = vmatpush1.msra.mxu0 0.0
    %661 = vmatprep.subr.mxu0 0.0
    %662 = vmatpush1.msra.mxu0 0.0
    %663 = vmatprep.subr.mxu0 0.0
    %664 = vmatpush1.msra.mxu0 0.0
    %665 = vmatprep.subr.mxu0 0.0
    %666 = vmatpush1.msra.mxu0 0.0
    %667 = vmatprep.subr.mxu0 0.0
    %668 = vmatpush1.msra.mxu0 0.0
    %669 = vmatprep.subr.mxu0 0.0
    %670 = vmatpush1.msra.mxu0 0.0
    %671 = vmatprep.subr.mxu0 0.0
    %672 = vmatpush1.msra.mxu0 0.0
    %673 = vmatprep.subr.mxu0 0.0
    %674 = vmatpush1.msra.mxu0 0.0
    %675 = vmatprep.subr.mxu0 0.0
    %676 = vmatpush1.msra.mxu0 0.0
    %677 = vmatprep.subr.mxu0 0.0
    %678 = vmatpush1.msra.mxu0 0.0
    %679 = vmatprep.subr.mxu0 0.0
    %680 = vmatpush1.msra.mxu0 0.0
    %681 = vmatprep.subr.mxu0 0.0
    %682 = vmatpush1.msra.mxu0 0.0
    %683 = vmatprep.mubr.f32.mxu0 0.0
    %v684 = vand.u32 %v26, 4294901760
    %685 = vmatmul.mubr.f32.gmra.mrb[0].mxu0 %v684
    %v686 = vpop.f32.mrb[0].mxu0
    %v687 = vadd.f32 %v600, %v686
    %v688 = vpop.f32.mrb[0].mxu0
    %689 = vdwg.mxu0
    %v690 = vmul.f32 %v687, %v32
    %691 = vst [vmem:[%s2] sm:$0x1] %v690
    // Predicated region
    $region14: #{skyrmion_phi_i.1} parent=1 // pred_check
      _
    $region15: #{skyrmion_phi_i.1} parent=1 // pred_check_branch
      %693 = sbr.rel (0) target = $region17
    $region16: #{skyrmion_phi_i.1} parent=1 // pred_region
      _
    $region17: #{skyrmion_phi_i.1} parent=1 // pred_fallthru
      _
    // Predicated region
    $region18: #{skyrmion_phi_i.1} parent=1 // pred_check
      _
    $region19: #{skyrmion_phi_i.1} parent=1 // pred_check_branch
      %695 = sbr.rel (0) target = $region21
    $region20: #{skyrmion_phi_i.1} parent=1 // pred_region
      _
    $region21: #{skyrmion_phi_i.1} parent=1 // pred_fallthru
      _
    %696 = vsyncpa [#allocation3], 1

</llo_original>
